<compile_context>
chip_gen: v7x
topology: tpu7x:2x2x1
jax: 0.10.0
libtpu: 0.0.40
codegen_flags: <defaults>
</compile_context>

<pallas_src>
import functools

import jax
import jax.numpy as jnp
from jax.experimental import pallas as pl
from jax.experimental.pallas import tpu as pltpu


def _round_up(x, m):
    return ((x + m - 1) // m) * m


def _cond_kernel(ids_ref, tok_ref, pos_ref, gamma_ref, beta_ref, w_ref, b_ref,
                 out_ref, *, d_orig):
    # ids_ref   : (R,  1)   int32  token ids (rows padded to a multiple of 8)
    # tok_ref   : (Vp, Dp)  token-embedding table (zero-padded rows / lanes)
    # pos_ref   : (R,  Dp)  per-row positional embeddings (already tiled)
    # gamma_ref : (1,  Dp)  LayerNorm scale  (zero-padded -> pads inert)
    # beta_ref  : (1,  Dp)  LayerNorm shift  (zero-padded)
    # w_ref     : (Dp, Hp)  projection weight (zero-padded)
    # b_ref     : (1,  Hp)  projection bias   (zero-padded)
    # out_ref   : (R,  Hp)

    ids = ids_ref[...]                                   # (R, 1) int32
    R = ids.shape[0]
    Vp = tok_ref.shape[0]

    # One-hot gather on the MXU: x[r, :] = tok_emb[ids[r]] + pos[r].
    iota_v = jax.lax.broadcasted_iota(jnp.int32, (R, Vp), 1)
    onehot = (iota_v == ids).astype(jnp.float32)         # (R, Vp)
    x = jnp.dot(onehot, tok_ref[...],
                preferred_element_type=jnp.float32) + pos_ref[...]   # (R, Dp)

    # LayerNorm over the ORIGINAL d_orig features; padded lanes are zero so
    # sums over Dp lanes equal sums over the first d_orig lanes.
    inv_d = 1.0 / d_orig
    mu = jnp.sum(x, axis=-1, keepdims=True) * inv_d      # (R, 1)
    msq = jnp.sum(x * x, axis=-1, keepdims=True) * inv_d
    var = jnp.maximum(msq - mu * mu, 0.0)
    xn = (x - mu) * jax.lax.rsqrt(var + 1e-5)
    # gamma/beta zero on padded lanes -> padded lanes of xn become exactly 0.
    xn = xn * gamma_ref[...] + beta_ref[...]

    # Projection on the MXU (f32 accumulate).
    y = jnp.dot(xn, w_ref[...], preferred_element_type=jnp.float32)
    out_ref[...] = (y + b_ref[...]).astype(out_ref.dtype)


def get_learned_conditioning(ids_2d, tok_emb_p, pos_p, gamma_p, beta_p, w_p, b_p,
                             *, d_orig):
    """ids_2d: (R, 1) int32 (R multiple of 8); padded params; returns (R, Hp) f32."""
    R = ids_2d.shape[0]
    Vp, Dp = tok_emb_p.shape
    Hp = w_p.shape[1]

    kernel = functools.partial(_cond_kernel, d_orig=float(d_orig))

    return pl.pallas_call(
        kernel,
        out_shape=jax.ShapeDtypeStruct((R, Hp), jnp.float32),
        grid_spec=pltpu.PrefetchScalarGridSpec(
            num_scalar_prefetch=0,
            grid=(1,),                                   # single fused step
            in_specs=[
                pl.BlockSpec((R, 1), lambda i: (0, 0)),      # ids
                pl.BlockSpec((Vp, Dp), lambda i: (0, 0)),    # token table
                pl.BlockSpec((R, Dp), lambda i: (0, 0)),     # pos (tiled)
                pl.BlockSpec((1, Dp), lambda i: (0, 0)),     # gamma
                pl.BlockSpec((1, Dp), lambda i: (0, 0)),     # beta
                pl.BlockSpec((Dp, Hp), lambda i: (0, 0)),    # W
                pl.BlockSpec((1, Hp), lambda i: (0, 0)),     # b
            ],
            out_specs=pl.BlockSpec((R, Hp), lambda i: (0, 0)),
        ),
        compiler_params=pltpu.CompilerParams(
            dimension_semantics=("arbitrary",),          # 1-step grid
        ),
    )(ids_2d, tok_emb_p, pos_p, gamma_p, beta_p, w_p, b_p)


class LatentConditioning:
    """JAX/Pallas re-implementation of the PyTorch LatentConditioning wrapper."""

    def __init__(self, vocab=64, seq=8, d_model=32, hidden=32, key=None):
        if key is None:
            key = jax.random.PRNGKey(0)
        k_tok, k_pos, k_w = jax.random.split(key, 3)
        self.vocab = vocab
        self.seq = seq
        self.d_model = d_model
        self.hidden = hidden

        # Unpadded ("true") parameters — also used by the pure-JAX reference.
        self.tok_emb = jax.random.normal(k_tok, (vocab, d_model), jnp.float32) * 0.02
        self.pos_emb = jax.random.normal(k_pos, (seq, d_model), jnp.float32) * 0.02
        self.gamma = jnp.ones((d_model,), jnp.float32)
        self.beta = jnp.zeros((d_model,), jnp.float32)
        self.w = jax.random.normal(k_w, (d_model, hidden), jnp.float32) * (
            1.0 / jnp.sqrt(d_model)
        )
        self.b = jnp.zeros((hidden,), jnp.float32)

        # Lane-dense zero-padded copies for the kernel (built once).
        Dp = _round_up(d_model, 128)
        Hp = _round_up(hidden, 128)
        Vp = _round_up(vocab, 128)          # contraction dim of one-hot gather
        self._Dp, self._Hp, self._Vp = Dp, Hp, Vp
        self.tok_emb_p = jnp.pad(self.tok_emb,
                                 ((0, Vp - vocab), (0, Dp - d_model)))
        pos_p = jnp.pad(self.pos_emb, ((0, 0), (0, Dp - d_model)))
        self.gamma_p = jnp.pad(self.gamma.reshape(1, d_model),
                               ((0, 0), (0, Dp - d_model)))
        self.beta_p = jnp.pad(self.beta.reshape(1, d_model),
                              ((0, 0), (0, Dp - d_model)))
        self.w_p = jnp.pad(self.w, ((0, Dp - d_model), (0, Hp - hidden)))
        self.b_p = jnp.pad(self.b.reshape(1, hidden), ((0, 0), (0, Hp - hidden)))

        # Only the last prompt's (cond, uncond) pair is ever returned, so the
        # kernel always processes rows = 2*seq (padded up to a multiple of 8).
        rows = 2 * seq
        self._rows = rows
        self._rows_p = _round_up(rows, 8)
        pos2 = jnp.tile(pos_p, (2, 1))                   # (2*seq, Dp)
        self.pos2_p = jnp.pad(pos2, ((0, self._rows_p - rows), (0, 0)))

    def _tokenize(self, txt):
        # Deterministic toy tokenizer: char codes mod vocab, padded with 0.
        ids = [ord(c) % self.vocab for c in txt][: self.seq]
        ids = ids + [0] * (self.seq - len(ids))
        return jnp.asarray(ids, jnp.int32)

    def __call__(self, prompts):
        if not prompts:
            return None, None
        # The original module overwrites (conditioning, unconditional) each
        # loop iteration and returns only the LAST prompt's pair — so compute
        # just that pair: rows = 2*seq regardless of len(prompts).
        txt = prompts[-1]
        ids_flat = jnp.concatenate([self._tokenize(txt), self._tokenize("")])
        ids_2d = jnp.pad(ids_flat, (0, self._rows_p - self._rows)) \
                    .reshape(self._rows_p, 1).astype(jnp.int32)

        out = get_learned_conditioning(
            ids_2d, self.tok_emb_p, self.pos2_p,
            self.gamma_p, self.beta_p, self.w_p, self.b_p,
            d_orig=self.d_model,
        )                                               # (rows_p, Hp)
        out = out[: self._rows, : self.hidden].reshape(2, self.seq, self.hidden)

        conditioning = out[0:1]    # (1, S, H) — matches [txt] batch of 1
        unconditional = out[1:2]   # (1, S, H) — matches ['']
        return conditioning, unconditional


if __name__ == "__main__":
    key = jax.random.PRNGKey(0)
    module = LatentConditioning(vocab=64, seq=8, d_model=32, hidden=32, key=key)

    # Multiple prompts: original module keeps only the last one's results.
    prompts = ["an astronaut riding a horse", "a painting of a cat"]
    cond, uncond = module(prompts)
    cond = jax.block_until_ready(cond)
    uncond = jax.block_until_ready(uncond)

    # Pure-JAX reference (unpadded parameters) for correctness.
    def ref_one(ids):
        emb = module.tok_emb[ids] + module.pos_emb             # (S, D)
        mu = jnp.mean(emb, axis=-1, keepdims=True)
        var = jnp.mean((emb - mu) ** 2, axis=-1, keepdims=True)
        xn = (emb - mu) * jax.lax.rsqrt(var + 1e-5) * module.gamma + module.beta
        return xn @ module.w + module.b                        # (S, H)

    exp_cond = ref_one(module._tokenize(prompts[-1]))
    exp_uncond = ref_one(module._tokenize(""))

    assert cond.shape == (1, 8, 32) and uncond.shape == (1, 8, 32)
    assert jnp.allclose(cond[0], exp_cond, atol=1e-4, rtol=1e-4)
    assert jnp.allclose(uncond[0], exp_uncond, atol=1e-4, rtol=1e-4)

    print("KERNEL_OK")
</pallas_src>

<mosaic_0001>
module attributes {stable_mosaic.version = 11 : i64} {
  func.func @_cond_kernel(%arg0: i32, %arg1: memref<16x1xi32, #tpu.memory_space<vmem>>, %arg2: memref<128x128xf32, #tpu.memory_space<vmem>>, %arg3: memref<16x128xf32, #tpu.memory_space<vmem>>, %arg4: memref<1x128xf32, #tpu.memory_space<vmem>>, %arg5: memref<1x128xf32, #tpu.memory_space<vmem>>, %arg6: memref<128x128xf32, #tpu.memory_space<vmem>>, %arg7: memref<1x128xf32, #tpu.memory_space<vmem>>, %arg8: memref<16x128xf32, #tpu.memory_space<vmem>>) attributes {dimension_semantics = [#tpu.dimension_semantics<arbitrary>], iteration_bounds = array<i64: 1>, scalar_prefetch = 0 : i64, scratch_operands = 0 : i64, tpu.core_type = #tpu.core_type<tc>, window_params = [{pipeline_mode = #tpu.pipeline_mode<synchronous>, transform_indices = @transform_0, window_bounds = array<i64: 16, 1>}, {pipeline_mode = #tpu.pipeline_mode<synchronous>, transform_indices = @transform_1, window_bounds = array<i64: 128, 128>}, {pipeline_mode = #tpu.pipeline_mode<synchronous>, transform_indices = @transform_2, window_bounds = array<i64: 16, 128>}, {pipeline_mode = #tpu.pipeline_mode<synchronous>, transform_indices = @transform_3, window_bounds = array<i64: 1, 128>}, {pipeline_mode = #tpu.pipeline_mode<synchronous>, transform_indices = @transform_4, window_bounds = array<i64: 1, 128>}, {pipeline_mode = #tpu.pipeline_mode<synchronous>, transform_indices = @transform_5, window_bounds = array<i64: 128, 128>}, {pipeline_mode = #tpu.pipeline_mode<synchronous>, transform_indices = @transform_6, window_bounds = array<i64: 1, 128>}, {pipeline_mode = #tpu.pipeline_mode<synchronous>, transform_indices = @transform_7, window_bounds = array<i64: 16, 128>}]} {
    %c0 = arith.constant 0 : index
    %c0_0 = arith.constant 0 : index
    %0 = vector.load %arg1[%c0, %c0_0] : memref<16x1xi32, #tpu.memory_space<vmem>>, vector<16x1xi32>
    %1 = tpu.iota {dimensions = array<i32: 1>} : vector<16x128xi32>
    %2 = vector.broadcast %0 : vector<16x1xi32> to vector<16x128xi32>
    %3 = arith.cmpi eq, %1, %2 : vector<16x128xi32>
    %4 = arith.extui %3 : vector<16x128xi1> to vector<16x128xi32>
    %5 = arith.sitofp %4 : vector<16x128xi32> to vector<16x128xf32>
    %c0_1 = arith.constant 0 : index
    %c0_2 = arith.constant 0 : index
    %6 = vector.load %arg2[%c0_1, %c0_2] : memref<128x128xf32, #tpu.memory_space<vmem>>, vector<128x128xf32>
    %cst = arith.constant dense<0.000000e+00> : vector<16x128xf32>
    %7 = tpu.matmul %5, %6, %cst {dimension_numbers = #tpu.dot_dimension_numbers<[1], [0], [0], [1], [0, 0, 1, 1], [], []>} : vector<16x128xf32>, vector<128x128xf32>, vector<16x128xf32> -> vector<16x128xf32>
    %c0_3 = arith.constant 0 : index
    %c0_4 = arith.constant 0 : index
    %8 = vector.load %arg3[%c0_3, %c0_4] : memref<16x128xf32, #tpu.memory_space<vmem>>, vector<16x128xf32>
    %9 = arith.addf %7, %8 : vector<16x128xf32>
    %cst_5 = arith.constant dense<0.000000e+00> : vector<16xf32>
    %10 = vector.multi_reduction <add>, %9, %cst_5 [1] : vector<16x128xf32> to vector<16xf32>
    %11 = vector.shape_cast %10 : vector<16xf32> to vector<16x1xf32>
    %cst_6 = arith.constant 3.125000e-02 : f32
    %12 = vector.broadcast %cst_6 : f32 to vector<16x1xf32>
    %13 = arith.mulf %11, %12 : vector<16x1xf32>
    %14 = arith.mulf %9, %9 : vector<16x128xf32>
    %cst_7 = arith.constant dense<0.000000e+00> : vector<16xf32>
    %15 = vector.multi_reduction <add>, %14, %cst_7 [1] : vector<16x128xf32> to vector<16xf32>
    %16 = vector.shape_cast %15 : vector<16xf32> to vector<16x1xf32>
    %cst_8 = arith.constant 3.125000e-02 : f32
    %17 = vector.broadcast %cst_8 : f32 to vector<16x1xf32>
    %18 = arith.mulf %16, %17 : vector<16x1xf32>
    %19 = arith.mulf %13, %13 : vector<16x1xf32>
    %20 = arith.subf %18, %19 : vector<16x1xf32>
    %cst_9 = arith.constant 0.000000e+00 : f32
    %21 = vector.broadcast %cst_9 : f32 to vector<16x1xf32>
    %22 = arith.maximumf %20, %21 : vector<16x1xf32>
    %23 = vector.broadcast %13 : vector<16x1xf32> to vector<16x128xf32>
    %24 = arith.subf %9, %23 : vector<16x128xf32>
    %cst_10 = arith.constant 9.99999974E-6 : f32
    %25 = vector.broadcast %cst_10 : f32 to vector<16x1xf32>
    %26 = arith.addf %22, %25 : vector<16x1xf32>
    %27 = math.rsqrt %26 : vector<16x1xf32>
    %28 = vector.broadcast %27 : vector<16x1xf32> to vector<16x128xf32>
    %29 = arith.mulf %24, %28 : vector<16x128xf32>
    %c0_11 = arith.constant 0 : index
    %c0_12 = arith.constant 0 : index
    %30 = vector.load %arg4[%c0_11, %c0_12] : memref<1x128xf32, #tpu.memory_space<vmem>>, vector<1x128xf32>
    %31 = vector.broadcast %30 : vector<1x128xf32> to vector<16x128xf32>
    %32 = arith.mulf %29, %31 : vector<16x128xf32>
    %c0_13 = arith.constant 0 : index
    %c0_14 = arith.constant 0 : index
    %33 = vector.load %arg5[%c0_13, %c0_14] : memref<1x128xf32, #tpu.memory_space<vmem>>, vector<1x128xf32>
    %34 = vector.broadcast %33 : vector<1x128xf32> to vector<16x128xf32>
    %35 = arith.addf %32, %34 : vector<16x128xf32>
    %c0_15 = arith.constant 0 : index
    %c0_16 = arith.constant 0 : index
    %36 = vector.load %arg6[%c0_15, %c0_16] : memref<128x128xf32, #tpu.memory_space<vmem>>, vector<128x128xf32>
    %cst_17 = arith.constant dense<0.000000e+00> : vector<16x128xf32>
    %37 = tpu.matmul %35, %36, %cst_17 {dimension_numbers = #tpu.dot_dimension_numbers<[1], [0], [0], [1], [0, 0, 1, 1], [], []>} : vector<16x128xf32>, vector<128x128xf32>, vector<16x128xf32> -> vector<16x128xf32>
    %c0_18 = arith.constant 0 : index
    %c0_19 = arith.constant 0 : index
    %38 = vector.load %arg7[%c0_18, %c0_19] : memref<1x128xf32, #tpu.memory_space<vmem>>, vector<1x128xf32>
    %39 = vector.broadcast %38 : vector<1x128xf32> to vector<16x128xf32>
    %40 = arith.addf %37, %39 : vector<16x128xf32>
    %c0_20 = arith.constant 0 : index
    %c0_21 = arith.constant 0 : index
    %41 = vector.load %arg8[%c0_20, %c0_21] : memref<16x128xf32, #tpu.memory_space<vmem>>, vector<16x128xf32>
    tpu.vector_store %arg8[%c0_20, %c0_21], %40 {strides = array<i32>} : memref<16x128xf32, #tpu.memory_space<vmem>>, vector<16x128xf32>,
    return
  }
  func.func @transform_0(%arg0: i32) -> (i32, i32) {
    %c0_i32 = arith.constant 0 : i32
    %c0_i32_0 = arith.constant 0 : i32
    %c0_i32_1 = arith.constant 0 : i32
    return %c0_i32, %c0_i32_0 : i32, i32
  }
  func.func @transform_1(%arg0: i32) -> (i32, i32) {
    %c0_i32 = arith.constant 0 : i32
    %c0_i32_0 = arith.constant 0 : i32
    %c0_i32_1 = arith.constant 0 : i32
    return %c0_i32, %c0_i32_0 : i32, i32
  }
  func.func @transform_2(%arg0: i32) -> (i32, i32) {
    %c0_i32 = arith.constant 0 : i32
    %c0_i32_0 = arith.constant 0 : i32
    %c0_i32_1 = arith.constant 0 : i32
    return %c0_i32, %c0_i32_0 : i32, i32
  }
  func.func @transform_3(%arg0: i32) -> (i32, i32) {
    %c0_i32 = arith.constant 0 : i32
    %c0_i32_0 = arith.constant 0 : i32
    %c0_i32_1 = arith.constant 0 : i32
    return %c0_i32, %c0_i32_0 : i32, i32
  }
  func.func @transform_4(%arg0: i32) -> (i32, i32) {
    %c0_i32 = arith.constant 0 : i32
    %c0_i32_0 = arith.constant 0 : i32
    %c0_i32_1 = arith.constant 0 : i32
    return %c0_i32, %c0_i32_0 : i32, i32
  }
  func.func @transform_5(%arg0: i32) -> (i32, i32) {
    %c0_i32 = arith.constant 0 : i32
    %c0_i32_0 = arith.constant 0 : i32
    %c0_i32_1 = arith.constant 0 : i32
    return %c0_i32, %c0_i32_0 : i32, i32
  }
  func.func @transform_6(%arg0: i32) -> (i32, i32) {
    %c0_i32 = arith.constant 0 : i32
    %c0_i32_0 = arith.constant 0 : i32
    %c0_i32_1 = arith.constant 0 : i32
    return %c0_i32, %c0_i32_0 : i32, i32
  }
  func.func @transform_7(%arg0: i32) -> (i32, i32) {
    %c0_i32 = arith.constant 0 : i32
    %c0_i32_0 = arith.constant 0 : i32
    %c0_i32_1 = arith.constant 0 : i32
    return %c0_i32, %c0_i32_0 : i32, i32
  }
}

</mosaic_0001>

<llo_original>
// kernel: tpu_custom_call.1
$region0: #{tpu_custom_call.1}
  #allocation0 [shape = 'u32[]', space=smem, size = 0x4, offset = 0x4, fixed_abs, tag = 'smem constant byte address 0x4 - core index']
  #allocation1 [shape = 'u32[144,128]{1,0:T(1,128)}', space=vmem, size = 0x12000, scoped, tag = 'internal scratch']
  %s0 = inlined_call_operand.vmem [shape: s32[16,1], index: 0, kind: input, shape index: {}]
  %s1 = inlined_call_operand.hbm [shape: f32[128,128], index: 1, kind: input, shape index: {}]
  %s2 = inlined_call_operand.vmem [shape: f32[16,128], index: 2, kind: input, shape index: {}]
  %s3 = inlined_call_operand.vmem [shape: f32[1,128], index: 3, kind: input, shape index: {}]
  %s4 = inlined_call_operand.vmem [shape: f32[1,128], index: 4, kind: input, shape index: {}]
  %s5 = inlined_call_operand.hbm [shape: f32[128,128], index: 5, kind: input, shape index: {}]
  %s6 = inlined_call_operand.vmem [shape: f32[1,128], index: 6, kind: input, shape index: {}]
  %s7 = inlined_call_operand.hbm [shape: f32[16,128], index: 7, kind: output, shape index: {}]
  %s8 = sld [smem:[#allocation0]]
  $region46: #{tpu_custom_call.1} parent=0
    _
  %s10 = ssub.s32 1, %s8
  %s11 = scalar_select 0, %s10, %s8
  $region1: #{tpu_custom_call.1} parent=0
    #allocation2 [shape = 'u8[65536]{0}', space=vmem, size = 0x10000, scoped, tag = 'input window, operand 1, single buffered']
    #allocation3 [shape = 's32[1]{0}', space=sflag, size = 0x4, scoped, tag = 'scoped memory for tpu_custom_call.1']
    #allocation4 [shape = 's32[1]{0}', space=sflag, size = 0x4, scoped, tag = 'scoped memory for tpu_custom_call.1']
    #allocation5 [shape = 'u8[65536]{0}', space=vmem, size = 0x10000, scoped, tag = 'input window, operand 5, single buffered']
    #allocation6 [shape = 's32[1]{0}', space=sflag, size = 0x4, scoped, tag = 'scoped memory for tpu_custom_call.1']
    #allocation7 [shape = 'u8[8192]{0}', space=vmem, size = 0x2000, scoped, tag = 'output window, operand 0, single buffered']
    %12 = vsyncpa [#allocation3], 0
    %13 = vsyncpa [#allocation6], 0
    %14 = vsyncpa [#allocation4], 0
    // Predicated region
    $region2: #{tpu_custom_call.1} parent=1 // pred_check
      _
    $region3: #{tpu_custom_call.1} parent=1 // pred_check_branch
      %16 = sbr.rel (0) target = $region5
    $region4: #{tpu_custom_call.1} parent=1 // pred_region
      _
    $region5: #{tpu_custom_call.1} parent=1 // pred_fallthru
      _
    // Predicated region
    $region6: #{tpu_custom_call.1} parent=1 // pred_check
      _
    $region7: #{tpu_custom_call.1} parent=1 // pred_check_branch
      %18 = sbr.rel (0) target = $region9
    $region8: #{tpu_custom_call.1} parent=1 // pred_region
      %s20 = ssub.s32 2048, 2048
      %21 = vsyncadd [#allocation3], %s20
      %s22 = sshll.u32 [#allocation2], 4
      %s23 = int_to_ptr.vmem [resolvable:$true] %s22
      %28 = dma.hbm_to_vmem [thread:$0]  %s1, 2048, %s23, [#allocation3], 128, 128, 8
    $region9: #{tpu_custom_call.1} parent=1 // pred_fallthru
      _
    // Predicated region
    $region10: #{tpu_custom_call.1} parent=1 // pred_check
      _
    $region11: #{tpu_custom_call.1} parent=1 // pred_check_branch
      %30 = sbr.rel (0) target = $region13
    $region12: #{tpu_custom_call.1} parent=1 // pred_region
      _
    $region13: #{tpu_custom_call.1} parent=1 // pred_fallthru
      _
    // Predicated region
    $region14: #{tpu_custom_call.1} parent=1 // pred_check
      _
    $region15: #{tpu_custom_call.1} parent=1 // pred_check_branch
      %32 = sbr.rel (0) target = $region17
    $region16: #{tpu_custom_call.1} parent=1 // pred_region
      _
    $region17: #{tpu_custom_call.1} parent=1 // pred_fallthru
      _
    // Predicated region
    $region18: #{tpu_custom_call.1} parent=1 // pred_check
      _
    $region19: #{tpu_custom_call.1} parent=1 // pred_check_branch
      %34 = sbr.rel (0) target = $region21
    $region20: #{tpu_custom_call.1} parent=1 // pred_region
      _
    $region21: #{tpu_custom_call.1} parent=1 // pred_fallthru
      _
    // Predicated region
    $region22: #{tpu_custom_call.1} parent=1 // pred_check
      _
    $region23: #{tpu_custom_call.1} parent=1 // pred_check_branch
      %36 = sbr.rel (0) target = $region25
    $region24: #{tpu_custom_call.1} parent=1 // pred_region
      %s38 = ssub.s32 2048, 2048
      %39 = vsyncadd [#allocation6], %s38
      %s40 = sshll.u32 [#allocation5], 4
      %s41 = int_to_ptr.vmem [resolvable:$true] %s40
      %46 = dma.hbm_to_vmem [thread:$0]  %s5, 2048, %s41, [#allocation6], 128, 128, 8
    $region25: #{tpu_custom_call.1} parent=1 // pred_fallthru
      _
    // Predicated region
    $region26: #{tpu_custom_call.1} parent=1 // pred_check
      _
    $region27: #{tpu_custom_call.1} parent=1 // pred_check_branch
      %48 = sbr.rel (0) target = $region29
    $region28: #{tpu_custom_call.1} parent=1 // pred_region
      _
    $region29: #{tpu_custom_call.1} parent=1 // pred_fallthru
      _
    // Predicated region
    $region30: #{tpu_custom_call.1} parent=1 // pred_check
      _
    $region31: #{tpu_custom_call.1} parent=1 // pred_check_branch
      %50 = sbr.rel (0) target = $region33
    $region32: #{tpu_custom_call.1} parent=1 // pred_region
      %51 = dma.done [#allocation3], 2048
    $region33: #{tpu_custom_call.1} parent=1 // pred_fallthru
      _
    // Predicated region
    $region34: #{tpu_custom_call.1} parent=1 // pred_check
      _
    $region35: #{tpu_custom_call.1} parent=1 // pred_check_branch
      %53 = sbr.rel (0) target = $region37
    $region36: #{tpu_custom_call.1} parent=1 // pred_region
      %54 = dma.done [#allocation6], 2048
    $region37: #{tpu_custom_call.1} parent=1 // pred_fallthru
      _
    %v55 = vld [vmem:[%s0] sm:$0xff]
    %v56 = vld [vmem:[%s0 + $0x8] sm:$0xff]
    %v57 = vlaneseq
    %v58 = vand.u32 %v57, 127
    %59 = vset.pattern.permute.xlu0 0
    %60 = vperm.xlu0 %59, %v55
    %v61 = vpop.permute.xlu0 %60
    %62 = vset.pattern.permute.xlu0 0
    %63 = vperm.xlu0 %62, %v56
    %v64 = vpop.permute.xlu0 %63
    %vm65 = vcmp.eq.s32.totalorder %v58, %v61
    %vm66 = vcmp.eq.s32.totalorder %v58, %v64
    %v67 = vsel %vm65, 1, 0
    %v68 = vsel %vm66, 1, 0
    %v69 = vcvt.s32.f32 %v67
    %v70 = vcvt.s32.f32 %v68
    %v71 = vld [vmem:[#allocation2] sm:$0xff]
    %v72 = vld [vmem:[#allocation2 + $0x8] sm:$0xff]
    %v73 = vld [vmem:[#allocation2 + $0x10] sm:$0xff]
    %v74 = vld [vmem:[#allocation2 + $0x18] sm:$0xff]
    %v75 = vld [vmem:[#allocation2 + $0x20] sm:$0xff]
    %v76 = vld [vmem:[#allocation2 + $0x28] sm:$0xff]
    %v77 = vld [vmem:[#allocation2 + $0x30] sm:$0xff]
    %v78 = vld [vmem:[#allocation2 + $0x38] sm:$0xff]
    %v79 = vld [vmem:[#allocation2 + $0x40] sm:$0xff]
    %v80 = vld [vmem:[#allocation2 + $0x48] sm:$0xff]
    %v81 = vld [vmem:[#allocation2 + $0x50] sm:$0xff]
    %v82 = vld [vmem:[#allocation2 + $0x58] sm:$0xff]
    %v83 = vld [vmem:[#allocation2 + $0x60] sm:$0xff]
    %v84 = vld [vmem:[#allocation2 + $0x68] sm:$0xff]
    %v85 = vld [vmem:[#allocation2 + $0x70] sm:$0xff]
    %v86 = vld [vmem:[#allocation2 + $0x78] sm:$0xff]
    %v87 = vld [vmem:[%s2] sm:$0xff]
    %v88 = vld [vmem:[%s2 + $0x8] sm:$0xff]
    %89 = vmatprep.subr.mxu0 0.0
    %90 = vmatpush1.msra.mxu0 %v71
    %91 = vmatprep.subr.mxu0 0.0
    %92 = vmatpush1.msra.mxu0 %v72
    %93 = vmatprep.subr.mxu0 0.0
    %94 = vmatpush1.msra.mxu0 %v73
    %95 = vmatprep.subr.mxu0 0.0
    %96 = vmatpush1.msra.mxu0 %v74
    %97 = vmatprep.subr.mxu0 0.0
    %98 = vmatpush1.msra.mxu0 %v75
    %99 = vmatprep.subr.mxu0 0.0
    %100 = vmatpush1.msra.mxu0 %v76
    %101 = vmatprep.subr.mxu0 0.0
    %102 = vmatpush1.msra.mxu0 %v77
    %103 = vmatprep.subr.mxu0 0.0
    %104 = vmatpush1.msra.mxu0 %v78
    %105 = vmatprep.subr.mxu0 0.0
    %106 = vmatpush1.msra.mxu0 %v79
    %107 = vmatprep.subr.mxu0 0.0
    %108 = vmatpush1.msra.mxu0 %v80
    %109 = vmatprep.subr.mxu0 0.0
    %110 = vmatpush1.msra.mxu0 %v81
    %111 = vmatprep.subr.mxu0 0.0
    %112 = vmatpush1.msra.mxu0 %v82
    %113 = vmatprep.subr.mxu0 0.0
    %114 = vmatpush1.msra.mxu0 %v83
    %115 = vmatprep.subr.mxu0 0.0
    %116 = vmatpush1.msra.mxu0 %v84
    %117 = vmatprep.subr.mxu0 0.0
    %118 = vmatpush1.msra.mxu0 %v85
    %119 = vmatprep.subr.mxu0 0.0
    %120 = vmatpush1.msra.mxu0 %v86
    %121 = vmatprep.subr.mxu0 0.0
    %122 = vmatpush1.msra.mxu0 0.0
    %123 = vmatprep.subr.mxu0 0.0
    %124 = vmatpush1.msra.mxu0 0.0
    %125 = vmatprep.subr.mxu0 0.0
    %126 = vmatpush1.msra.mxu0 0.0
    %127 = vmatprep.subr.mxu0 0.0
    %128 = vmatpush1.msra.mxu0 0.0
    %129 = vmatprep.subr.mxu0 0.0
    %130 = vmatpush1.msra.mxu0 0.0
    %131 = vmatprep.subr.mxu0 0.0
    %132 = vmatpush1.msra.mxu0 0.0
    %133 = vmatprep.subr.mxu0 0.0
    %134 = vmatpush1.msra.mxu0 0.0
    %135 = vmatprep.subr.mxu0 0.0
    %136 = vmatpush1.msra.mxu0 0.0
    %137 = vmatprep.subr.mxu0 0.0
    %138 = vmatpush1.msra.mxu0 0.0
    %139 = vmatprep.subr.mxu0 0.0
    %140 = vmatpush1.msra.mxu0 0.0
    %141 = vmatprep.subr.mxu0 0.0
    %142 = vmatpush1.msra.mxu0 0.0
    %143 = vmatprep.subr.mxu0 0.0
    %144 = vmatpush1.msra.mxu0 0.0
    %145 = vmatprep.subr.mxu0 0.0
    %146 = vmatpush1.msra.mxu0 0.0
    %147 = vmatprep.subr.mxu0 0.0
    %148 = vmatpush1.msra.mxu0 0.0
    %149 = vmatprep.subr.mxu0 0.0
    %150 = vmatpush1.msra.mxu0 0.0
    %151 = vmatprep.subr.mxu0 0.0
    %152 = vmatpush1.msra.mxu0 0.0
    %153 = vmatprep.mubr.f32.mxu0 0.0
    %154 = vmatmul.mubr.f32.gmra.mrb[0].mxu0 %v69
    %v155 = vpop.f32.mrb[0].mxu0
    %v156 = vadd.f32 %v87, %v155
    %v157 = vpop.f32.mrb[0].mxu0
    %158 = vmatprep.mubr.f32.mxu0 0.0
    %159 = vmatmul.mubr.f32.gmra.mrb[0].mxu0 %v70
    %v160 = vpop.f32.mrb[0].mxu0
    %v161 = vadd.f32 %v88, %v160
    %v162 = vpop.f32.mrb[0].mxu0
    %163 = vdwg.mxu0
    %164 = vadd.xlane.f32.xlu0 %v156
    %v165 = vpop.xlane.xlu0 %164
    %166 = vadd.xlane.f32.xlu0 %v161
    %v167 = vpop.xlane.xlu0 %166
    %v168 = vmul.f32 %v165, 0.03125
    %v169 = vmul.f32 %v167, 0.03125
    %v170 = vmul.f32 %v156, %v156
    %v171 = vmul.f32 %v161, %v161
    %172 = vadd.xlane.f32.xlu0 %v170
    %v173 = vpop.xlane.xlu0 %172
    %174 = vadd.xlane.f32.xlu0 %v171
    %v175 = vpop.xlane.xlu0 %174
    %v176 = vmul.f32 %v173, 0.03125
    %v177 = vmul.f32 %v175, 0.03125
    %v178 = vmul.f32 %v168, %v168
    %v179 = vmul.f32 %v169, %v169
    %v180 = vsub.f32 %v176, %v178
    %v181 = vsub.f32 %v177, %v179
    %v182 = vmax.f32 %v180, 0.0
    %v183 = vmax.f32 %v181, 0.0
    %v184 = vsub.f32 %v156, %v168
    %v185 = vsub.f32 %v161, %v169
    %v186 = vadd.f32 %v182, 1e-05
    %v187 = vadd.f32 %v183, 1e-05
    %v188 = vrsqrt.pop %v186
    %v189 = vrsqrt.pop %v187
    %v190 = vmul.f32 %v184, %v188
    %v191 = vmul.f32 %v185, %v189
    %v192 = vld [vmem:[%s3] sm:$0x1]
    %v194 = vlaneseq
    %v195 = vshrl.u32 %v194, 7
    %v196 = vsub.s32 0, %v195
    %v197 = vrot.slane %v192, %v196
    %v199 = vmul.f32 %v190, %v197
    %v200 = vmul.f32 %v191, %v197
    %v201 = vld [vmem:[%s4] sm:$0x1]
    %v203 = vlaneseq
    %v204 = vshrl.u32 %v203, 7
    %v205 = vsub.s32 0, %v204
    %v206 = vrot.slane %v201, %v205
    %v208 = vadd.f32 %v199, %v206
    %v209 = vadd.f32 %v200, %v206
    %v210 = vld [vmem:[#allocation5] sm:$0xff]
    %v211 = vld [vmem:[#allocation5 + $0x8] sm:$0xff]
    %v212 = vld [vmem:[#allocation5 + $0x10] sm:$0xff]
    %v213 = vld [vmem:[#allocation5 + $0x18] sm:$0xff]
    %v214 = vld [vmem:[#allocation5 + $0x20] sm:$0xff]
    %v215 = vld [vmem:[#allocation5 + $0x28] sm:$0xff]
    %v216 = vld [vmem:[#allocation5 + $0x30] sm:$0xff]
    %v217 = vld [vmem:[#allocation5 + $0x38] sm:$0xff]
    %v218 = vld [vmem:[#allocation5 + $0x40] sm:$0xff]
    %v219 = vld [vmem:[#allocation5 + $0x48] sm:$0xff]
    %v220 = vld [vmem:[#allocation5 + $0x50] sm:$0xff]
    %v221 = vld [vmem:[#allocation5 + $0x58] sm:$0xff]
    %v222 = vld [vmem:[#allocation5 + $0x60] sm:$0xff]
    %v223 = vld [vmem:[#allocation5 + $0x68] sm:$0xff]
    %v224 = vld [vmem:[#allocation5 + $0x70] sm:$0xff]
    %v225 = vld [vmem:[#allocation5 + $0x78] sm:$0xff]
    %v226 = vld [vmem:[%s6] sm:$0x1]
    %v228 = vlaneseq
    %v229 = vshrl.u32 %v228, 7
    %v230 = vsub.s32 0, %v229
    %v231 = vrot.slane %v226, %v230
    %233 = vmatprep.subr.mxu0 0.0
    %234 = vmatpush1.msra.mxu0 %v210
    %235 = vmatprep.subr.mxu0 0.0
    %236 = vmatpush1.msra.mxu0 %v211
    %237 = vmatprep.subr.mxu0 0.0
    %238 = vmatpush1.msra.mxu0 %v212
    %239 = vmatprep.subr.mxu0 0.0
    %240 = vmatpush1.msra.mxu0 %v213
    %241 = vmatprep.subr.mxu0 0.0
    %242 = vmatpush1.msra.mxu0 %v214
    %243 = vmatprep.subr.mxu0 0.0
    %244 = vmatpush1.msra.mxu0 %v215
    %245 = vmatprep.subr.mxu0 0.0
    %246 = vmatpush1.msra.mxu0 %v216
    %247 = vmatprep.subr.mxu0 0.0
    %248 = vmatpush1.msra.mxu0 %v217
    %249 = vmatprep.subr.mxu0 0.0
    %250 = vmatpush1.msra.mxu0 %v218
    %251 = vmatprep.subr.mxu0 0.0
    %252 = vmatpush1.msra.mxu0 %v219
    %253 = vmatprep.subr.mxu0 0.0
    %254 = vmatpush1.msra.mxu0 %v220
    %255 = vmatprep.subr.mxu0 0.0
    %256 = vmatpush1.msra.mxu0 %v221
    %257 = vmatprep.subr.mxu0 0.0
    %258 = vmatpush1.msra.mxu0 %v222
    %259 = vmatprep.subr.mxu0 0.0
    %260 = vmatpush1.msra.mxu0 %v223
    %261 = vmatprep.subr.mxu0 0.0
    %262 = vmatpush1.msra.mxu0 %v224
    %263 = vmatprep.subr.mxu0 0.0
    %264 = vmatpush1.msra.mxu0 %v225
    %265 = vmatprep.subr.mxu0 0.0
    %266 = vmatpush1.msra.mxu0 0.0
    %267 = vmatprep.subr.mxu0 0.0
    %268 = vmatpush1.msra.mxu0 0.0
    %269 = vmatprep.subr.mxu0 0.0
    %270 = vmatpush1.msra.mxu0 0.0
    %271 = vmatprep.subr.mxu0 0.0
    %272 = vmatpush1.msra.mxu0 0.0
    %273 = vmatprep.subr.mxu0 0.0
    %274 = vmatpush1.msra.mxu0 0.0
    %275 = vmatprep.subr.mxu0 0.0
    %276 = vmatpush1.msra.mxu0 0.0
    %277 = vmatprep.subr.mxu0 0.0
    %278 = vmatpush1.msra.mxu0 0.0
    %279 = vmatprep.subr.mxu0 0.0
    %280 = vmatpush1.msra.mxu0 0.0
    %281 = vmatprep.subr.mxu0 0.0
    %282 = vmatpush1.msra.mxu0 0.0
    %283 = vmatprep.subr.mxu0 0.0
    %284 = vmatpush1.msra.mxu0 0.0
    %285 = vmatprep.subr.mxu0 0.0
    %286 = vmatpush1.msra.mxu0 0.0
    %287 = vmatprep.subr.mxu0 0.0
    %288 = vmatpush1.msra.mxu0 0.0
    %289 = vmatprep.subr.mxu0 0.0
    %290 = vmatpush1.msra.mxu0 0.0
    %291 = vmatprep.subr.mxu0 0.0
    %292 = vmatpush1.msra.mxu0 0.0
    %293 = vmatprep.subr.mxu0 0.0
    %294 = vmatpush1.msra.mxu0 0.0
    %295 = vmatprep.subr.mxu0 0.0
    %296 = vmatpush1.msra.mxu0 0.0
    %297 = vmatprep.mubr.f32.mxu0 0.0
    %298 = vmatmul.mubr.f32.gmra.mrb[0].mxu0 %v208
    %v299 = vpop.f32.mrb[0].mxu0
    %v300 = vadd.f32 %v231, %v299
    %v301 = vpop.f32.mrb[0].mxu0
    %302 = vmatprep.mubr.f32.mxu0 0.0
    %303 = vmatmul.mubr.f32.gmra.mrb[0].mxu0 %v209
    %v304 = vpop.f32.mrb[0].mxu0
    %v305 = vadd.f32 %v231, %v304
    %v306 = vpop.f32.mrb[0].mxu0
    %307 = vdwg.mxu0
    %308 = vst [vmem:[#allocation7] sm:$0xff] %v300
    %309 = vst [vmem:[#allocation7 + $0x8] sm:$0xff] %v305
    // Predicated region
    $region38: #{tpu_custom_call.1} parent=1 // pred_check
      _
    $region39: #{tpu_custom_call.1} parent=1 // pred_check_branch
      %311 = sbr.rel (0) target = $region41
    $region40: #{tpu_custom_call.1} parent=1 // pred_region
      %s313 = ssub.s32 256, 256
      %314 = vsyncadd [#allocation4], %s313
      %s315 = sshll.u32 [#allocation7], 4
      %s316 = int_to_ptr.vmem [resolvable:$true] %s315
      %321 = dma.vmem_to_hbm [thread:$0]  %s316, 256, %s7, [#allocation4], 128, 128, 8
    $region41: #{tpu_custom_call.1} parent=1 // pred_fallthru
      _
    // Predicated region
    $region42: #{tpu_custom_call.1} parent=1 // pred_check
      _
    $region43: #{tpu_custom_call.1} parent=1 // pred_check_branch
      %323 = sbr.rel (0) target = $region45
    $region44: #{tpu_custom_call.1} parent=1 // pred_region
      %324 = dma.done [#allocation4], 256
    $region45: #{tpu_custom_call.1} parent=1 // pred_fallthru
      _
    %325 = vsyncpa [#allocation3], 1
    %326 = vsyncpa [#allocation6], 1
    %327 = vsyncpa [#allocation4], 1

</llo_original>
